<compile_context>
chip_gen: v6e
topology: v6e:2x2x1
jax: 0.10.0
libtpu: 0.0.40
codegen_flags: <defaults>
</compile_context>

<pallas_src>
import jax
import jax.numpy as jnp
from jax.experimental import pallas as pl
from jax.experimental.pallas import tpu as pltpu

IN, HID, OUT = 10, 50, 1
K_PAD = 16          # IN padded to a sublane-tile-aligned contraction dim
H_PAD = 64          # HID padded to a multiple of 8 sublanes
B_TILE = 2048       # batch (lane) tile; sweep 1024-4096


def mlp_kernel(xT_ref, w1_ref, tail_ref, o_ref):
    xT = xT_ref[...]                                   # (K_PAD, bt), rows >= IN are zero
    w1 = w1_ref[...]                                   # (H_PAD, K_PAD), padded rows/lanes zero

    # fc1 on the MXU: (H_PAD, K_PAD) @ (K_PAD, bt) -> (H_PAD, bt), f32 accumulate.
    hT = jnp.dot(w1, xT, preferred_element_type=jnp.float32)

    b1c = tail_ref[:, 0:1]                             # (H_PAD, 1) f32, padded rows zero
    w2c = tail_ref[:, 1:2]                             # (H_PAD, 1) f32, padded rows zero
    b2 = tail_ref[0:1, 2:3]                            # (1, 1)     f32

    # bias + ReLU on the VPU (padded hidden rows stay exactly zero).
    hT = jnp.maximum(hT + b1c, 0.0)

    # fc2 (OUT == 1): VPU multiply + XLU sublane reduce -> lane-dense (1, bt).
    o = jnp.sum(hT * w2c, axis=0, keepdims=True) + b2
    o_ref[...] = o.astype(o_ref.dtype)


def pack_params(w1, b1, w2, b2, dtype=jnp.float32):
    """One-time packing (checkpoint-load time), NOT per forward call.

    w1: (HID, IN), b1: (HID,), w2: (OUT, HID), b2: (OUT,)  -- nn.Linear layout.
    Returns (w1_pad, tail):
      w1_pad : (H_PAD, K_PAD) in `dtype` (bf16 halves x/weight HBM bytes)
      tail   : (H_PAD, 8) f32 columns: [b1 | w2 row | b2 | 0...]
    Zero padding is a correctness invariant (keeps padded hidden rows at 0).
    """
    w1_pad = jnp.zeros((H_PAD, K_PAD), dtype).at[:HID, :IN].set(w1.astype(dtype))
    tail = jnp.zeros((H_PAD, 8), jnp.float32)
    tail = tail.at[:HID, 0].set(b1.astype(jnp.float32))
    tail = tail.at[:HID, 1].set(w2[0].astype(jnp.float32))
    tail = tail.at[0, 2].set(b2[0].astype(jnp.float32))
    return w1_pad, tail


def _pick_bt(batch):
    """Batch (lane) tile: either == batch or a multiple of 128; >=2 tiles when
    batch >= 256 so both v7x TensorCores get work."""
    if batch > B_TILE:
        return B_TILE
    if batch >= 256:
        half = (batch + 1) // 2
        return min(B_TILE, ((half + 127) // 128) * 128)
    return batch


def simple_net_forward(x, params):
    """x: (batch, 10); params: output of pack_params. Returns (batch, 1) f32."""
    w1_pad, tail = params
    batch = x.shape[0]
    bt = _pick_bt(batch)
    grid = (pl.cdiv(batch, bt),)

    # Caller-side layout plumbing (plain XLA, outside the kernel):
    # (batch, IN) -> zero-padded (K_PAD, batch), cast to the weight dtype.
    xT = jnp.zeros((K_PAD, batch), w1_pad.dtype).at[:IN, :].set(x.T.astype(w1_pad.dtype))

    out_row = pl.pallas_call(
        mlp_kernel,
        out_shape=jax.ShapeDtypeStruct((1, batch), jnp.float32),
        grid=grid,
        in_specs=[
            pl.BlockSpec((K_PAD, bt), lambda i: (0, i)),        # batch-tiled activations
            pl.BlockSpec((H_PAD, K_PAD), lambda i: (0, 0)),     # grid-invariant fc1 weight
            pl.BlockSpec((H_PAD, 8), lambda i: (0, 0)),         # grid-invariant b1/w2/b2
        ],
        out_specs=pl.BlockSpec((1, bt), lambda i: (0, i)),      # lane-dense output row
        compiler_params=pltpu.CompilerParams(
            dimension_semantics=("parallel",)),                 # both TCs on v7x
    )(xT, w1_pad, tail)

    return out_row.reshape(batch, OUT)


def init_params(key):
    # Deterministic init mirroring nn.Linear shapes (kaiming-uniform-ish).
    k1, k2, k3, k4 = jax.random.split(key, 4)
    lim1 = 1.0 / jnp.sqrt(IN)
    lim2 = 1.0 / jnp.sqrt(HID)
    w1 = jax.random.uniform(k1, (HID, IN), jnp.float32, -lim1, lim1)
    b1 = jax.random.uniform(k2, (HID,), jnp.float32, -lim1, lim1)
    w2 = jax.random.uniform(k3, (OUT, HID), jnp.float32, -lim2, lim2)
    b2 = jax.random.uniform(k4, (OUT,), jnp.float32, -lim2, lim2)
    return w1, b1, w2, b2


if __name__ == "__main__":
    key = jax.random.PRNGKey(0)
    kx, kp = jax.random.split(key)
    B = 8
    x = jax.random.normal(kx, (B, IN), jnp.float32)
    w1, b1, w2, b2 = init_params(kp)

    # One-time packing. (Pass dtype=jnp.bfloat16 here for the bf16 fast path at
    # large batch; kept f32 in the demo for an exact reference check.)
    params = pack_params(w1, b1, w2, b2)
    params = jax.block_until_ready(params)

    fwd = jax.jit(simple_net_forward)
    out = fwd(x, params)
    out = jax.block_until_ready(out)

    # Reference in plain JAX (same math as the PyTorch module).
    ref = jnp.maximum(x @ w1.T + b1, 0.0) @ w2.T + b2
    assert out.shape == (B, OUT)
    assert jnp.allclose(out, ref, atol=1e-5, rtol=1e-5)
    print("KERNEL_OK")
</pallas_src>

<mosaic_0001>
module attributes {stable_mosaic.version = 11 : i64} {
  func.func @mlp_kernel(%arg0: i32, %arg1: memref<16x8xf32, #tpu.memory_space<vmem>>, %arg2: memref<64x16xf32, #tpu.memory_space<vmem>>, %arg3: memref<64x8xf32, #tpu.memory_space<vmem>>, %arg4: memref<1x8xf32, #tpu.memory_space<vmem>>) attributes {dimension_semantics = [#tpu.dimension_semantics<parallel>], iteration_bounds = array<i64: 1>, scalar_prefetch = 0 : i64, scratch_operands = 0 : i64, tpu.core_type = #tpu.core_type<tc>, window_params = [{transform_indices = @transform_0, window_bounds = array<i64: 16, 8>}, {pipeline_mode = #tpu.pipeline_mode<synchronous>, transform_indices = @transform_1, window_bounds = array<i64: 64, 16>}, {pipeline_mode = #tpu.pipeline_mode<synchronous>, transform_indices = @transform_2, window_bounds = array<i64: 64, 8>}, {transform_indices = @transform_3, window_bounds = array<i64: 1, 8>}]} {
    %c0 = arith.constant 0 : index
    %c0_0 = arith.constant 0 : index
    %0 = vector.load %arg1[%c0, %c0_0] : memref<16x8xf32, #tpu.memory_space<vmem>>, vector<16x8xf32>
    %c0_1 = arith.constant 0 : index
    %c0_2 = arith.constant 0 : index
    %1 = vector.load %arg2[%c0_1, %c0_2] : memref<64x16xf32, #tpu.memory_space<vmem>>, vector<64x16xf32>
    %cst = arith.constant dense<0.000000e+00> : vector<64x8xf32>
    %2 = tpu.matmul %1, %0, %cst {dimension_numbers = #tpu.dot_dimension_numbers<[1], [0], [0], [1], [0, 0, 1, 1], [], []>} : vector<64x16xf32>, vector<16x8xf32>, vector<64x8xf32> -> vector<64x8xf32>
    %c0_3 = arith.constant 0 : index
    %c0_4 = arith.constant 0 : index
    %3 = vector.load %arg3[%c0_3, %c0_4] : memref<64x8xf32, #tpu.memory_space<vmem>>, vector<64x1xf32>
    %c0_5 = arith.constant 0 : index
    %c1 = arith.constant 1 : index
    %4 = vector.load %arg3[%c0_5, %c1] : memref<64x8xf32, #tpu.memory_space<vmem>>, vector<64x1xf32>
    %c0_6 = arith.constant 0 : index
    %c2 = arith.constant 2 : index
    %5 = vector.load %arg3[%c0_6, %c2] : memref<64x8xf32, #tpu.memory_space<vmem>>, vector<1x1xf32>
    %6 = vector.broadcast %3 : vector<64x1xf32> to vector<64x8xf32>
    %7 = arith.addf %2, %6 : vector<64x8xf32>
    %cst_7 = arith.constant 0.000000e+00 : f32
    %8 = vector.broadcast %cst_7 : f32 to vector<64x8xf32>
    %9 = arith.maximumf %7, %8 : vector<64x8xf32>
    %10 = vector.broadcast %4 : vector<64x1xf32> to vector<64x8xf32>
    %11 = arith.mulf %9, %10 : vector<64x8xf32>
    %cst_8 = arith.constant dense<0.000000e+00> : vector<8xf32>
    %12 = vector.multi_reduction <add>, %11, %cst_8 [0] : vector<64x8xf32> to vector<8xf32>
    %13 = vector.shape_cast %12 : vector<8xf32> to vector<1x8xf32>
    %14 = vector.broadcast %5 : vector<1x1xf32> to vector<1x8xf32>
    %15 = arith.addf %13, %14 : vector<1x8xf32>
    %c0_9 = arith.constant 0 : index
    %c0_10 = arith.constant 0 : index
    %16 = vector.load %arg4[%c0_9, %c0_10] : memref<1x8xf32, #tpu.memory_space<vmem>>, vector<1x8xf32>
    tpu.vector_store %arg4[%c0_9, %c0_10], %15 {strides = array<i32>} : memref<1x8xf32, #tpu.memory_space<vmem>>, vector<1x8xf32>,
    return
  }
  func.func @transform_0(%arg0: i32) -> (i32, i32) {
    %c0_i32 = arith.constant 0 : i32
    %c0_i32_0 = arith.constant 0 : i32
    return %c0_i32, %arg0 : i32, i32
  }
  func.func @transform_1(%arg0: i32) -> (i32, i32) {
    %c0_i32 = arith.constant 0 : i32
    %c0_i32_0 = arith.constant 0 : i32
    %c0_i32_1 = arith.constant 0 : i32
    return %c0_i32, %c0_i32_0 : i32, i32
  }
  func.func @transform_2(%arg0: i32) -> (i32, i32) {
    %c0_i32 = arith.constant 0 : i32
    %c0_i32_0 = arith.constant 0 : i32
    %c0_i32_1 = arith.constant 0 : i32
    return %c0_i32, %c0_i32_0 : i32, i32
  }
  func.func @transform_3(%arg0: i32) -> (i32, i32) {
    %c0_i32 = arith.constant 0 : i32
    %c0_i32_0 = arith.constant 0 : i32
    return %c0_i32, %arg0 : i32, i32
  }
}

</mosaic_0001>

<llo_original>
// kernel: simple_net_forward.1
$region0: #{simple_net_forward.1}
  #allocation0 [shape = 'u32[]', space=smem, size = 0x4, offset = 0x4, fixed_abs, tag = 'smem constant byte address 0x4 - core index']
  #allocation1 [shape = 'u32[144,128]{1,0:T(1,128)}', space=vmem, size = 0x12000, scoped, tag = 'internal scratch']
  %s0 = inlined_call_operand.vmem [shape: f32[16,8], index: 0, kind: input, shape index: {}]
  %s1 = inlined_call_operand.vmem [shape: f32[64,16], index: 1, kind: input, shape index: {}]
  %s2 = inlined_call_operand.vmem [shape: f32[64,8], index: 2, kind: input, shape index: {}]
  %s3 = inlined_call_operand.hbm [shape: f32[1,8], index: 3, kind: output, shape index: {}]
  %s4 = sld [smem:[#allocation0]]
  $region22: #{simple_net_forward.1} parent=0
    _
  %s6 = ssub.s32 1, %s4
  %s7 = scalar_select 0, %s6, %s4
  $region1: #{simple_net_forward.1} parent=0
    #allocation2 [shape = 'u8[512]{0}', space=vmem, size = 0x400, scoped, tag = 'output window, operand 0, single buffered']
    #allocation3 [shape = 's32[1]{0}', space=sflag, size = 0x4, scoped, tag = 'scoped memory for simple_net_forward.1']
    %8 = vsyncpa [#allocation3], 0
    // Predicated region
    $region2: #{simple_net_forward.1} parent=1 // pred_check
      _
    $region3: #{simple_net_forward.1} parent=1 // pred_check_branch
      %10 = sbr.rel (0) target = $region5
    $region4: #{simple_net_forward.1} parent=1 // pred_region
      _
    $region5: #{simple_net_forward.1} parent=1 // pred_fallthru
      _
    // Predicated region
    $region6: #{simple_net_forward.1} parent=1 // pred_check
      _
    $region7: #{simple_net_forward.1} parent=1 // pred_check_branch
      %12 = sbr.rel (0) target = $region9
    $region8: #{simple_net_forward.1} parent=1 // pred_region
      _
    $region9: #{simple_net_forward.1} parent=1 // pred_fallthru
      _
    // Predicated region
    $region10: #{simple_net_forward.1} parent=1 // pred_check
      _
    $region11: #{simple_net_forward.1} parent=1 // pred_check_branch
      %14 = sbr.rel (0) target = $region13
    $region12: #{simple_net_forward.1} parent=1 // pred_region
      _
    $region13: #{simple_net_forward.1} parent=1 // pred_fallthru
      _
    %v15 = vld [vmem:[%s0] sm:$0xff]
    %v16 = vld [vmem:[%s0 + $0x8] sm:$0xff]
    %v17 = vld [vmem:[%s1] sm:$0xff]
    %v18 = vld [vmem:[%s1 + $0x8] sm:$0xff]
    %v19 = vld [vmem:[%s1 + $0x10] sm:$0xff]
    %v20 = vld [vmem:[%s1 + $0x18] sm:$0xff]
    %v21 = vld [vmem:[%s1 + $0x20] sm:$0xff]
    %v22 = vld [vmem:[%s1 + $0x28] sm:$0xff]
    %v23 = vld [vmem:[%s1 + $0x30] sm:$0xff]
    %v24 = vld [vmem:[%s1 + $0x38] sm:$0xff]
    %v25 = vld [vmem:[%s2] sm:$0xff]
    %v26 = vld [vmem:[%s2 + $0x8] sm:$0xff]
    %v27 = vld [vmem:[%s2 + $0x10] sm:$0xff]
    %v28 = vld [vmem:[%s2 + $0x18] sm:$0xff]
    %v29 = vld [vmem:[%s2 + $0x20] sm:$0xff]
    %v30 = vld [vmem:[%s2 + $0x28] sm:$0xff]
    %v31 = vld [vmem:[%s2 + $0x30] sm:$0xff]
    %v32 = vld [vmem:[%s2 + $0x38] sm:$0xff]
    %v33 = vld [vmem:[%s2] sm:$0x1]
    %35 = vset.pattern.permute.xlu0 0
    %36 = vperm.xlu0 %35, %v25
    %v37 = vpop.permute.xlu0 %36
    %40 = vset.pattern.permute.xlu0 0
    %41 = vperm.xlu0 %40, %v26
    %v42 = vpop.permute.xlu0 %41
    %45 = vset.pattern.permute.xlu0 0
    %46 = vperm.xlu0 %45, %v27
    %v47 = vpop.permute.xlu0 %46
    %50 = vset.pattern.permute.xlu0 0
    %51 = vperm.xlu0 %50, %v28
    %v52 = vpop.permute.xlu0 %51
    %55 = vset.pattern.permute.xlu0 0
    %56 = vperm.xlu0 %55, %v29
    %v57 = vpop.permute.xlu0 %56
    %60 = vset.pattern.permute.xlu0 0
    %61 = vperm.xlu0 %60, %v30
    %v62 = vpop.permute.xlu0 %61
    %65 = vset.pattern.permute.xlu0 0
    %66 = vperm.xlu0 %65, %v31
    %v67 = vpop.permute.xlu0 %66
    %70 = vset.pattern.permute.xlu0 0
    %71 = vperm.xlu0 %70, %v32
    %v72 = vpop.permute.xlu0 %71
    %vm74 = vcmask 130048
    %v76 = vsel %vm74, %v17, 0
    %v79 = vsel %vm74, %v18, 0
    %v82 = vsel %vm74, %v19, 0
    %v85 = vsel %vm74, %v20, 0
    %v88 = vsel %vm74, %v21, 0
    %v91 = vsel %vm74, %v22, 0
    %v94 = vsel %vm74, %v23, 0
    %v97 = vsel %vm74, %v24, 0
    %99 = vmatprep.subr.mxu0 0.0
    %100 = vmatpush1.msra.mxu0 0.0
    %101 = vmatprep.subr.mxu0 0.0
    %102 = vmatpush1.msra.mxu0 0.0
    %103 = vmatprep.subr.mxu0 0.0
    %104 = vmatpush1.msra.mxu0 0.0
    %105 = vmatprep.subr.mxu0 0.0
    %106 = vmatpush1.msra.mxu0 0.0
    %107 = vmatprep.subr.mxu0 0.0
    %108 = vmatpush1.msra.mxu0 0.0
    %109 = vmatprep.subr.mxu0 0.0
    %110 = vmatpush1.msra.mxu0 0.0
    %111 = vmatprep.subr.mxu0 0.0
    %112 = vmatpush1.msra.mxu0 0.0
    %113 = vmatprep.subr.mxu0 0.0
    %114 = vmatpush1.msra.mxu0 0.0
    %115 = vmatprep.subr.mxu0 0.0
    %116 = vmatpush1.msra.mxu0 0.0
    %117 = vmatprep.subr.mxu0 0.0
    %118 = vmatpush1.msra.mxu0 0.0
    %119 = vmatprep.subr.mxu0 0.0
    %120 = vmatpush1.msra.mxu0 0.0
    %121 = vmatprep.subr.mxu0 0.0
    %122 = vmatpush1.msra.mxu0 0.0
    %123 = vmatprep.subr.mxu0 0.0
    %124 = vmatpush1.msra.mxu0 0.0
    %125 = vmatprep.subr.mxu0 0.0
    %126 = vmatpush1.msra.mxu0 0.0
    %127 = vmatprep.subr.mxu0 0.0
    %128 = vmatpush1.msra.mxu0 %v16
    %129 = vmatprep.subr.mxu0 0.0
    %130 = vmatpush1.msra.mxu0 %v15
    %131 = vmatprep.subr.mxu0 0.0
    %132 = vmatpush2.msra.mxu0 0.0
    %133 = vmatprep.subr.mxu0 0.0
    %134 = vmatpush2.msra.mxu0 0.0
    %135 = vmatprep.subr.mxu0 0.0
    %136 = vmatpush2.msra.mxu0 0.0
    %137 = vmatprep.subr.mxu0 0.0
    %138 = vmatpush2.msra.mxu0 0.0
    %139 = vmatprep.subr.mxu0 0.0
    %140 = vmatpush2.msra.mxu0 0.0
    %141 = vmatprep.subr.mxu0 0.0
    %142 = vmatpush2.msra.mxu0 0.0
    %143 = vmatprep.subr.mxu0 0.0
    %144 = vmatpush2.msra.mxu0 0.0
    %145 = vmatprep.subr.mxu0 0.0
    %146 = vmatpush2.msra.mxu0 0.0
    %147 = vmatprep.subr.mxu0 0.0
    %148 = vmatpush2.msra.mxu0 0.0
    %149 = vmatprep.subr.mxu0 0.0
    %150 = vmatpush2.msra.mxu0 0.0
    %151 = vmatprep.subr.mxu0 0.0
    %152 = vmatpush2.msra.mxu0 0.0
    %153 = vmatprep.subr.mxu0 0.0
    %154 = vmatpush2.msra.mxu0 0.0
    %155 = vmatprep.subr.mxu0 0.0
    %156 = vmatpush2.msra.mxu0 0.0
    %157 = vmatprep.subr.mxu0 0.0
    %158 = vmatpush2.msra.mxu0 0.0
    %159 = vmatprep.subr.mxu0 0.0
    %160 = vmatpush2.msra.mxu0 0.0
    %161 = vmatprep.subr.mxu0 0.0
    %162 = vmatpush2.msra.mxu0 0.0
    %163 = vmatprep.mubr.f32.mxu0 0.0
    %164 = vmatmul.mubr.f32.gmra.mxu0 %v76
    %v165 = vpop.f32.mrf.mxu0
    %v166 = vadd.f32 %v37, %v165
    %v167 = vpop.f32.mrf.mxu0
    %168 = vmatprep.mubr.f32.mxu0 0.0
    %169 = vmatmul.mubr.f32.gmra.mxu0 %v79
    %v170 = vpop.f32.mrf.mxu0
    %v171 = vadd.f32 %v42, %v170
    %v172 = vpop.f32.mrf.mxu0
    %173 = vmatprep.mubr.f32.mxu0 0.0
    %174 = vmatmul.mubr.f32.gmra.mxu0 %v82
    %v175 = vpop.f32.mrf.mxu0
    %v176 = vadd.f32 %v47, %v175
    %v177 = vpop.f32.mrf.mxu0
    %178 = vmatprep.mubr.f32.mxu0 0.0
    %179 = vmatmul.mubr.f32.gmra.mxu0 %v85
    %v180 = vpop.f32.mrf.mxu0
    %v181 = vadd.f32 %v52, %v180
    %v182 = vpop.f32.mrf.mxu0
    %183 = vmatprep.mubr.f32.mxu0 0.0
    %184 = vmatmul.mubr.f32.gmra.mxu0 %v88
    %v185 = vpop.f32.mrf.mxu0
    %v186 = vadd.f32 %v57, %v185
    %v187 = vpop.f32.mrf.mxu0
    %188 = vmatprep.mubr.f32.mxu0 0.0
    %189 = vmatmul.mubr.f32.gmra.mxu0 %v91
    %v190 = vpop.f32.mrf.mxu0
    %v191 = vadd.f32 %v62, %v190
    %v192 = vpop.f32.mrf.mxu0
    %193 = vmatprep.mubr.f32.mxu0 0.0
    %194 = vmatmul.mubr.f32.gmra.mxu0 %v94
    %v195 = vpop.f32.mrf.mxu0
    %v196 = vadd.f32 %v67, %v195
    %v197 = vpop.f32.mrf.mxu0
    %198 = vmatprep.mubr.f32.mxu0 0.0
    %199 = vmatmul.mubr.f32.gmra.mxu0 %v97
    %v200 = vpop.f32.mrf.mxu0
    %v201 = vadd.f32 %v72, %v200
    %v202 = vpop.f32.mrf.mxu0
    %203 = vdwg.mxu0
    %v204 = vmax.f32 %v166, 0.0
    %v205 = vmax.f32 %v171, 0.0
    %v206 = vmax.f32 %v176, 0.0
    %v207 = vmax.f32 %v181, 0.0
    %v208 = vmax.f32 %v186, 0.0
    %v209 = vmax.f32 %v191, 0.0
    %v210 = vmax.f32 %v196, 0.0
    %v211 = vmax.f32 %v201, 0.0
    %212 = vset.pattern.permute.xlu0 1
    %213 = vperm.xlu0 %212, %v25
    %v214 = vpop.permute.xlu0 %213
    %216 = vset.pattern.permute.xlu0 1
    %217 = vperm.xlu0 %216, %v26
    %v218 = vpop.permute.xlu0 %217
    %220 = vset.pattern.permute.xlu0 1
    %221 = vperm.xlu0 %220, %v27
    %v222 = vpop.permute.xlu0 %221
    %224 = vset.pattern.permute.xlu0 1
    %225 = vperm.xlu0 %224, %v28
    %v226 = vpop.permute.xlu0 %225
    %228 = vset.pattern.permute.xlu0 1
    %229 = vperm.xlu0 %228, %v29
    %v230 = vpop.permute.xlu0 %229
    %232 = vset.pattern.permute.xlu0 1
    %233 = vperm.xlu0 %232, %v30
    %v234 = vpop.permute.xlu0 %233
    %236 = vset.pattern.permute.xlu0 1
    %237 = vperm.xlu0 %236, %v31
    %v238 = vpop.permute.xlu0 %237
    %240 = vset.pattern.permute.xlu0 1
    %241 = vperm.xlu0 %240, %v32
    %v242 = vpop.permute.xlu0 %241
    %v244 = vmul.f32 %v204, %v214
    %v245 = vmul.f32 %v205, %v218
    %v246 = vmul.f32 %v206, %v222
    %v247 = vmul.f32 %v207, %v226
    %v248 = vmul.f32 %v208, %v230
    %v249 = vmul.f32 %v209, %v234
    %v250 = vmul.f32 %v210, %v238
    %v251 = vmul.f32 %v211, %v242
    %vm252 = vcmask 64512
    %v253 = vsel %vm252, %v244, 0.0
    %v254 = vsel %vm252, %v245, 0.0
    %v255 = vadd.f32 %v253, %v254
    %v256 = vsel %vm252, %v246, 0.0
    %v257 = vadd.f32 %v255, %v256
    %v258 = vsel %vm252, %v247, 0.0
    %v259 = vadd.f32 %v257, %v258
    %v260 = vsel %vm252, %v248, 0.0
    %v261 = vadd.f32 %v259, %v260
    %v262 = vsel %vm252, %v249, 0.0
    %v263 = vadd.f32 %v261, %v262
    %v264 = vsel %vm252, %v250, 0.0
    %v265 = vadd.f32 %v263, %v264
    %v266 = vsel %vm252, %v251, 0.0
    %v267 = vadd.f32 %v265, %v266
    %v268 = vrot.slane %v267, 4
    %v269 = vadd.f32 %v267, %v268
    %v270 = vrot.slane %v269, 2
    %v271 = vadd.f32 %v269, %v270
    %v272 = vrot.slane %v271, 1
    %v273 = vadd.f32 %v271, %v272
    %275 = vset.pattern.permute.xlu0 2
    %276 = vperm.xlu0 %275, %v33
    %v277 = vpop.permute.xlu0 %276
    %v279 = vadd.f32 %v273, %v277
    %vm280 = vcmask 57344
    %281 = vst.msk [vmem:[#allocation2] sm:$0x1] %vm280, %v279
    // Predicated region
    $region14: #{simple_net_forward.1} parent=1 // pred_check
      _
    $region15: #{simple_net_forward.1} parent=1 // pred_check_branch
      %283 = sbr.rel (0) target = $region17
    $region16: #{simple_net_forward.1} parent=1 // pred_region
      %s285 = ssub.s32 16, 16
      %286 = vsyncadd [#allocation3], %s285
      %s288 = sshll.u32 [#allocation2], 4
      %s289 = int_to_ptr.vmem [resolvable:$true] %s288
      %291 = dma.vmem_to_hbm [thread:$0]  %s289, 16, %s3, [#allocation3]
    $region17: #{simple_net_forward.1} parent=1 // pred_fallthru
      _
    // Predicated region
    $region18: #{simple_net_forward.1} parent=1 // pred_check
      _
    $region19: #{simple_net_forward.1} parent=1 // pred_check_branch
      %293 = sbr.rel (0) target = $region21
    $region20: #{simple_net_forward.1} parent=1 // pred_region
      %294 = dma.done [#allocation3], 16
    $region21: #{simple_net_forward.1} parent=1 // pred_fallthru
      _
    %295 = vsyncpa [#allocation3], 1

</llo_original>
